<compile_context>
chip_gen: v7x
topology: tpu7x:2x2x1
jax: 0.10.0
libtpu: 0.0.40
codegen_flags: <defaults>
</compile_context>

<pallas_src>
import functools
import math

import jax
import jax.numpy as jnp
from jax import lax
from jax.experimental import pallas as pl
from jax.experimental.pallas import tpu as pltpu

# ---- toy model dimensions (consistent with the module) ---------------------
B, S = 2, 8          # batch, sequence length
D_MODEL = 32         # embedding dimension
VOCAB = 64           # vocabulary size

ONE_HOT_MAX_VOCAB = 512   # below this a one-hot MXU matmul beats per-row DMAs
TOKEN_BLOCK = 8           # tokens gathered per grid step in the gather path


# ================= path A: tiny vocab — single-call one-hot MXU =============
def _onehot_kernel(ids_ref, table_ref, out_ref, *, scale):
    ids = ids_ref[...]                                   # (N, 1) int32
    table = table_ref[...]                               # (V, D)
    n = ids.shape[0]
    v = table.shape[0]

    # one-hot selection matrix; keep 1.0 in the one-hot (exact in any dtype)
    col = lax.broadcasted_iota(jnp.int32, (n, v), 1)     # (N, V)
    onehot = jnp.where(col == ids, 1.0, 0.0).astype(table.dtype)

    # (N, V) @ (V, D) on the MXU == table[ids]; scale the f32 accumulator
    acc = jnp.dot(onehot, table, preferred_element_type=jnp.float32)
    out_ref[...] = (acc * scale).astype(out_ref.dtype)


def _embed_onehot(ids_flat, table, scale):
    n = ids_flat.shape[0]
    _, d = table.shape
    return pl.pallas_call(
        functools.partial(_onehot_kernel, scale=scale),
        out_shape=jax.ShapeDtypeStruct((n, d), table.dtype),
        # no grid / no BlockSpecs: single invocation, full arrays in VMEM
    )(ids_flat.reshape(n, 1), table)


# ============ path B: large vocab — scalar-prefetch row gather ===============
def _gather_kernel(ids_ref, table_hbm, out_ref, rows, sem, *, scale, tokens):
    # ids_ref:   SMEM (N_pad,) int32 (scalar-prefetched token ids)
    # table_hbm: HBM ref (V, D) — never copied wholesale to VMEM
    # out_ref:   VMEM (tokens, D) output tile
    # rows:      VMEM (tokens, D) gather scratch
    # sem:       DMA semaphores, one per in-flight row
    base = pl.program_id(0) * tokens

    # issue all row DMAs for this token tile (they overlap), then wait
    for t in range(tokens):
        row = ids_ref[base + t]
        pltpu.make_async_copy(table_hbm.at[pl.ds(row, 1), :],
                              rows.at[pl.ds(t, 1), :],
                              sem.at[t]).start()
    for t in range(tokens):
        pltpu.make_async_copy(table_hbm.at[pl.ds(0, 1), :],
                              rows.at[pl.ds(t, 1), :],
                              sem.at[t]).wait()

    out_ref[...] = (rows[...].astype(jnp.float32) * scale).astype(out_ref.dtype)


def _embed_gather(ids_flat, table, scale):
    n = ids_flat.shape[0]
    _, d = table.shape
    n_pad = pl.cdiv(n, TOKEN_BLOCK) * TOKEN_BLOCK
    ids_pad = jnp.pad(ids_flat, (0, n_pad - n))          # pad ids → valid row 0

    out = pl.pallas_call(
        functools.partial(_gather_kernel, scale=scale, tokens=TOKEN_BLOCK),
        out_shape=jax.ShapeDtypeStruct((n_pad, d), table.dtype),
        grid_spec=pltpu.PrefetchScalarGridSpec(
            num_scalar_prefetch=1,
            grid=(n_pad // TOKEN_BLOCK,),
            in_specs=[pl.BlockSpec(memory_space=pl.ANY)],   # table stays in HBM
            out_specs=pl.BlockSpec((TOKEN_BLOCK, d), lambda i, ids: (i, 0)),
            scratch_shapes=[pltpu.VMEM((TOKEN_BLOCK, d), table.dtype),
                            pltpu.SemaphoreType.DMA((TOKEN_BLOCK,))],
        ),
        compiler_params=pltpu.CompilerParams(
            dimension_semantics=("parallel",)),             # 2 TCs on v7x
    )(ids_pad, table)
    return out[:n]


# ================================ wrapper ====================================
def input_embedding(ids, table):
    """ids: (B, S) int token indices; table: (vocab, d_model). → (B, S, d)."""
    b, s = ids.shape
    v, d = table.shape
    scale = math.sqrt(d)
    ids_flat = ids.reshape(b * s).astype(jnp.int32)
    if v <= ONE_HOT_MAX_VOCAB:
        out = _embed_onehot(ids_flat, table, scale)
    else:
        out = _embed_gather(ids_flat, table, scale)
    return out.reshape(b, s, d)


# ================================== main =====================================
if __name__ == "__main__":
    key = jax.random.PRNGKey(0)
    k_ids, k_tab, k_ids2, k_tab2 = jax.random.split(key, 4)

    # 1) toy size from the module spec — one-hot MXU path, single invocation
    ids = jax.random.randint(k_ids, (B, S), 0, VOCAB, dtype=jnp.int32)
    table = jax.random.normal(k_tab, (VOCAB, D_MODEL), jnp.float32)
    out = jax.block_until_ready(input_embedding(ids, table))
    ref = table[ids] * math.sqrt(D_MODEL)
    assert out.shape == (B, S, D_MODEL)
    assert jnp.allclose(out, ref, atol=1e-5, rtol=1e-5), "one-hot path mismatch"

    # 2) larger vocab — scalar-prefetch row gather, lane-dense d_model (128)
    V2, D2 = 2048, 128
    ids2 = jax.random.randint(k_ids2, (B, S), 0, V2, dtype=jnp.int32)
    table2 = jax.random.normal(k_tab2, (V2, D2), jnp.float32)
    out2 = jax.block_until_ready(input_embedding(ids2, table2))
    ref2 = table2[ids2] * math.sqrt(D2)
    assert out2.shape == (B, S, D2)
    assert jnp.allclose(out2, ref2, atol=1e-5, rtol=1e-5), "gather path mismatch"

    print("KERNEL_OK")
</pallas_src>

<mosaic_0001>
module attributes {stable_mosaic.version = 11 : i64} {
  func.func @_onehot_kernel(%arg0: memref<16x1xi32, #tpu.memory_space<vmem>>, %arg1: memref<64x32xf32, #tpu.memory_space<vmem>>, %arg2: memref<16x32xf32, #tpu.memory_space<vmem>>) attributes {dimension_semantics = [], scalar_prefetch = 0 : i64, scratch_operands = 0 : i64, tpu.core_type = #tpu.core_type<tc>} {
    %c0 = arith.constant 0 : index
    %c0_0 = arith.constant 0 : index
    %0 = vector.load %arg0[%c0, %c0_0] : memref<16x1xi32, #tpu.memory_space<vmem>>, vector<16x1xi32>
    %c0_1 = arith.constant 0 : index
    %c0_2 = arith.constant 0 : index
    %1 = vector.load %arg1[%c0_1, %c0_2] : memref<64x32xf32, #tpu.memory_space<vmem>>, vector<64x32xf32>
    %2 = tpu.iota {dimensions = array<i32: 1>} : vector<16x64xi32>
    %3 = vector.broadcast %0 : vector<16x1xi32> to vector<16x64xi32>
    %4 = arith.cmpi eq, %2, %3 : vector<16x64xi32>
    %cst = arith.constant 1.000000e+00 : f32
    %cst_3 = arith.constant 0.000000e+00 : f32
    %5 = vector.broadcast %cst : f32 to vector<16x64xf32>
    %6 = vector.broadcast %cst_3 : f32 to vector<16x64xf32>
    %7 = arith.select %4, %5, %6 : vector<16x64xi1>, vector<16x64xf32>
    %cst_4 = arith.constant dense<0.000000e+00> : vector<16x32xf32>
    %8 = tpu.matmul %7, %1, %cst_4 {dimension_numbers = #tpu.dot_dimension_numbers<[1], [0], [0], [1], [0, 0, 1, 1], [], []>} : vector<16x64xf32>, vector<64x32xf32>, vector<16x32xf32> -> vector<16x32xf32>
    %cst_5 = arith.constant 5.65685415 : f32
    %9 = vector.broadcast %cst_5 : f32 to vector<16x32xf32>
    %10 = arith.mulf %8, %9 : vector<16x32xf32>
    %c0_6 = arith.constant 0 : index
    %c0_7 = arith.constant 0 : index
    %11 = vector.load %arg2[%c0_6, %c0_7] : memref<16x32xf32, #tpu.memory_space<vmem>>, vector<16x32xf32>
    tpu.vector_store %arg2[%c0_6, %c0_7], %10 {strides = array<i32>} : memref<16x32xf32, #tpu.memory_space<vmem>>, vector<16x32xf32>,
    return
  }
}

</mosaic_0001>

<llo_original>
// kernel: tpu_custom_call.1
$region0: #{tpu_custom_call.1}
  #allocation0 [shape = 'u32[]', space=smem, size = 0x4, offset = 0x4, fixed_abs, tag = 'smem constant byte address 0x4 - core index']
  #allocation1 [shape = 'u32[144,128]{1,0:T(1,128)}', space=vmem, size = 0x12000, scoped, tag = 'internal scratch']
  %s0 = inlined_call_operand.vmem [shape: s32[16,1], index: 0, kind: input, shape index: {}]
  %s1 = inlined_call_operand.vmem [shape: f32[64,32], index: 1, kind: input, shape index: {}]
  %s2 = inlined_call_operand.hbm [shape: f32[16,32], index: 2, kind: output, shape index: {}]
  %s3 = sld [smem:[#allocation0]]
  $region18: #{tpu_custom_call.1} parent=0
    _
  %s5 = ssub.s32 1, %s3
  %s6 = scalar_select 0, %s5, %s3
  $region1: #{tpu_custom_call.1} parent=0
    #allocation2 [shape = 'u8[8192]{0}', space=vmem, size = 0x2000, scoped, tag = 'output window, operand 0, single buffered']
    #allocation3 [shape = 's32[1]{0}', space=sflag, size = 0x4, scoped, tag = 'scoped memory for tpu_custom_call.1']
    %7 = vsyncpa [#allocation3], 0
    // Predicated region
    $region2: #{tpu_custom_call.1} parent=1 // pred_check
      _
    $region3: #{tpu_custom_call.1} parent=1 // pred_check_branch
      %9 = sbr.rel (0) target = $region5
    $region4: #{tpu_custom_call.1} parent=1 // pred_region
      _
    $region5: #{tpu_custom_call.1} parent=1 // pred_fallthru
      _
    // Predicated region
    $region6: #{tpu_custom_call.1} parent=1 // pred_check
      _
    $region7: #{tpu_custom_call.1} parent=1 // pred_check_branch
      %11 = sbr.rel (0) target = $region9
    $region8: #{tpu_custom_call.1} parent=1 // pred_region
      _
    $region9: #{tpu_custom_call.1} parent=1 // pred_fallthru
      _
    %v12 = vld [vmem:[%s0] sm:$0xff]
    %v13 = vld [vmem:[%s0 + $0x8] sm:$0xff]
    %v14 = vld [vmem:[%s1] sm:$0xff]
    %v15 = vld [vmem:[%s1 + $0x8] sm:$0xff]
    %v16 = vld [vmem:[%s1 + $0x10] sm:$0xff]
    %v17 = vld [vmem:[%s1 + $0x18] sm:$0xff]
    %v18 = vld [vmem:[%s1 + $0x20] sm:$0xff]
    %v19 = vld [vmem:[%s1 + $0x28] sm:$0xff]
    %v20 = vld [vmem:[%s1 + $0x30] sm:$0xff]
    %v21 = vld [vmem:[%s1 + $0x38] sm:$0xff]
    %v22 = vlaneseq
    %v23 = vand.u32 %v22, 127
    %24 = vset.pattern.permute.xlu0 0
    %25 = vperm.xlu0 %24, %v12
    %v26 = vpop.permute.xlu0 %25
    %27 = vset.pattern.permute.xlu0 0
    %28 = vperm.xlu0 %27, %v13
    %v29 = vpop.permute.xlu0 %28
    %vm30 = vcmp.eq.s32.totalorder %v23, %v26
    %vm31 = vcmp.eq.s32.totalorder %v23, %v29
    %v32 = vsel %vm30, 1.0, 0.0
    %v33 = vsel %vm31, 1.0, 0.0
    %vm34 = vcmask 523264
    %v36 = vsel %vm34, %v32, 0
    %v39 = vsel %vm34, %v33, 0
    %41 = vmatprep.subr.mxu0 0.0
    %42 = vmatpush1.msra.mxu0 %v14
    %43 = vmatprep.subr.mxu0 0.0
    %44 = vmatpush1.msra.mxu0 %v15
    %45 = vmatprep.subr.mxu0 0.0
    %46 = vmatpush1.msra.mxu0 %v16
    %47 = vmatprep.subr.mxu0 0.0
    %48 = vmatpush1.msra.mxu0 %v17
    %49 = vmatprep.subr.mxu0 0.0
    %50 = vmatpush1.msra.mxu0 %v18
    %51 = vmatprep.subr.mxu0 0.0
    %52 = vmatpush1.msra.mxu0 %v19
    %53 = vmatprep.subr.mxu0 0.0
    %54 = vmatpush1.msra.mxu0 %v20
    %55 = vmatprep.subr.mxu0 0.0
    %56 = vmatpush1.msra.mxu0 %v21
    %57 = vmatprep.subr.mxu0 0.0
    %58 = vmatpush1.msra.mxu0 0.0
    %59 = vmatprep.subr.mxu0 0.0
    %60 = vmatpush1.msra.mxu0 0.0
    %61 = vmatprep.subr.mxu0 0.0
    %62 = vmatpush1.msra.mxu0 0.0
    %63 = vmatprep.subr.mxu0 0.0
    %64 = vmatpush1.msra.mxu0 0.0
    %65 = vmatprep.subr.mxu0 0.0
    %66 = vmatpush1.msra.mxu0 0.0
    %67 = vmatprep.subr.mxu0 0.0
    %68 = vmatpush1.msra.mxu0 0.0
    %69 = vmatprep.subr.mxu0 0.0
    %70 = vmatpush1.msra.mxu0 0.0
    %71 = vmatprep.subr.mxu0 0.0
    %72 = vmatpush1.msra.mxu0 0.0
    %73 = vmatprep.subr.mxu0 0.0
    %74 = vmatpush1.msra.mxu0 0.0
    %75 = vmatprep.subr.mxu0 0.0
    %76 = vmatpush1.msra.mxu0 0.0
    %77 = vmatprep.subr.mxu0 0.0
    %78 = vmatpush1.msra.mxu0 0.0
    %79 = vmatprep.subr.mxu0 0.0
    %80 = vmatpush1.msra.mxu0 0.0
    %81 = vmatprep.subr.mxu0 0.0
    %82 = vmatpush1.msra.mxu0 0.0
    %83 = vmatprep.subr.mxu0 0.0
    %84 = vmatpush1.msra.mxu0 0.0
    %85 = vmatprep.subr.mxu0 0.0
    %86 = vmatpush1.msra.mxu0 0.0
    %87 = vmatprep.subr.mxu0 0.0
    %88 = vmatpush1.msra.mxu0 0.0
    %89 = vmatprep.subr.mxu0 0.0
    %90 = vmatpush1.msra.mxu0 0.0
    %91 = vmatprep.subr.mxu0 0.0
    %92 = vmatpush1.msra.mxu0 0.0
    %93 = vmatprep.subr.mxu0 0.0
    %94 = vmatpush1.msra.mxu0 0.0
    %95 = vmatprep.subr.mxu0 0.0
    %96 = vmatpush1.msra.mxu0 0.0
    %97 = vmatprep.subr.mxu0 0.0
    %98 = vmatpush1.msra.mxu0 0.0
    %99 = vmatprep.subr.mxu0 0.0
    %100 = vmatpush1.msra.mxu0 0.0
    %101 = vmatprep.subr.mxu0 0.0
    %102 = vmatpush1.msra.mxu0 0.0
    %103 = vmatprep.subr.mxu0 0.0
    %104 = vmatpush1.msra.mxu0 0.0
    %105 = vmatprep.mubr.f32.mxu0 0.0
    %106 = vmatmul.mubr.f32.gmra.mrb[0].mxu0 %v36
    %v107 = vpop.f32.mrb[0].mxu0
    %v108 = vadd.f32 0.0, %v107
    %v109 = vpop.f32.mrb[0].mxu0
    %110 = vmatprep.mubr.f32.mxu0 0.0
    %111 = vmatmul.mubr.f32.gmra.mrb[0].mxu0 %v39
    %v112 = vpop.f32.mrb[0].mxu0
    %v113 = vadd.f32 0.0, %v112
    %v114 = vpop.f32.mrb[0].mxu0
    %115 = vdwg.mxu0
    %v116 = vmul.f32 %v108, 5.656854
    %v117 = vmul.f32 %v113, 5.656854
    %vm118 = vcmask 261120
    %119 = vst.msk [vmem:[#allocation2] sm:$0xff] %vm118, %v116
    %120 = vst.msk [vmem:[#allocation2 + $0x8] sm:$0xff] %vm118, %v117
    // Predicated region
    $region10: #{tpu_custom_call.1} parent=1 // pred_check
      _
    $region11: #{tpu_custom_call.1} parent=1 // pred_check_branch
      %122 = sbr.rel (0) target = $region13
    $region12: #{tpu_custom_call.1} parent=1 // pred_region
      %s124 = ssub.s32 256, 256
      %125 = vsyncadd [#allocation3], %s124
      %s126 = sshll.u32 [#allocation2], 4
      %s127 = int_to_ptr.vmem [resolvable:$true] %s126
      %132 = dma.vmem_to_hbm [thread:$0]  %s127, 256, %s2, [#allocation3], 128, 128, 8
    $region13: #{tpu_custom_call.1} parent=1 // pred_fallthru
      _
    // Predicated region
    $region14: #{tpu_custom_call.1} parent=1 // pred_check
      _
    $region15: #{tpu_custom_call.1} parent=1 // pred_check_branch
      %134 = sbr.rel (0) target = $region17
    $region16: #{tpu_custom_call.1} parent=1 // pred_region
      %135 = dma.done [#allocation3], 256
    $region17: #{tpu_custom_call.1} parent=1 // pred_fallthru
      _
    %136 = vsyncpa [#allocation3], 1

</llo_original>
